<compile_context>
chip_gen: v7x
topology: tpu7x:2x2x1
jax: 0.10.0
libtpu: 0.0.40
codegen_flags: <defaults>
</compile_context>

<pallas_src>
import functools
import math

import jax
import jax.numpy as jnp
from jax import lax
from jax.experimental import pallas as pl
from jax.experimental.pallas import tpu as pltpu

_LANE = 128
_SUBLANE = 8
_CHUNK_ROWS = 512                    # rows per in-kernel reduction step (256 KiB f32)
_BLOCK_BYTES_PER_INPUT = 2 << 20     # ~2 MiB of HBM per input per grid step
_VMEM_BUFFER_BUDGET = 16 << 20       # 2 inputs x 2 pipeline buffers guardrail
_VMEM_LIMIT_BYTES = 32 * 1024 * 1024


def _round_down(a, b):
    return (a // b) * b


def _kl_div_partial_kernel(x_ref, y_ref, o_ref, *, row_tile, chunk_rows):
    """Accumulate sum over this block of y*(log y - log x) into o_ref (8,128)."""
    inner = pl.program_id(1)

    @pl.when(inner == 0)
    def _():
        o_ref[...] = jnp.zeros_like(o_ref)

    n_chunks = row_tile // chunk_rows

    def body(c, acc):
        r0 = pl.multiple_of(c * chunk_rows, _SUBLANE)
        x = x_ref[pl.ds(r0, chunk_rows), :].astype(jnp.float32)
        y = y_ref[pl.ds(r0, chunk_rows), :].astype(jnp.float32)
        mask = y > 0.0
        safe_y = jnp.where(mask, y, jnp.float32(1.0))
        # Single EUP log of the ratio (instead of log(y) - log(x)); l = 0 where y == 0.
        term = jnp.where(mask, y * jnp.log(safe_y / x), jnp.float32(0.0))
        # Fold (chunk_rows, 128) -> (8, 128) with element-wise vreg adds only (VPU).
        return acc + jnp.sum(
            term.reshape(chunk_rows // _SUBLANE, _SUBLANE, _LANE), axis=0)

    acc = lax.fori_loop(0, n_chunks, body,
                        jnp.zeros((_SUBLANE, _LANE), jnp.float32))
    o_ref[...] += acc


def kl_div_loss(inp, target, *,
                block_bytes_per_input=_BLOCK_BYTES_PER_INPUT,
                par_slices=2,
                min_rows_per_slice=512):
    """KLDivLoss(size_average=True, reduce=True)(inp, target) -> scalar f32.

    `inp` and `target` are probabilities (the module logs `inp` internally).
    """
    assert inp.shape == target.shape
    total = math.prod(inp.shape)
    x_flat = jnp.ravel(inp)
    y_flat = jnp.ravel(target)

    dtype_bytes = max(jnp.dtype(inp.dtype).itemsize,
                      jnp.dtype(target.dtype).itemsize)
    rows_floor = total // _LANE

    bulk_rows = 0
    n_par = n_inner = row_tile = chunk_rows = 0
    if rows_floor >= _SUBLANE:
        # 2-TC split engages for any medium-sized input, independent of tile size.
        n_par = par_slices if (par_slices > 1 and
                               rows_floor >= par_slices * min_rows_per_slice) else 1
        rows_per_slice = rows_floor // n_par
        # Byte-budget tile sizing + VMEM guardrail (2 inputs x 2 buffers).
        row_budget = max(_SUBLANE, block_bytes_per_input // (_LANE * dtype_bytes))
        row_budget = min(row_budget, _VMEM_BUFFER_BUDGET // (4 * _LANE * dtype_bytes))
        if rows_per_slice >= _CHUNK_ROWS and row_budget >= _CHUNK_ROWS:
            row_tile = min(_round_down(row_budget, _CHUNK_ROWS),
                           _round_down(rows_per_slice, _CHUNK_ROWS))
            chunk_rows = _CHUNK_ROWS
        else:
            row_tile = max(_SUBLANE,
                           _round_down(min(row_budget, rows_per_slice), _SUBLANE))
            chunk_rows = row_tile
        n_inner = rows_per_slice // row_tile
        bulk_rows = n_par * n_inner * row_tile

    bulk_total = bulk_rows * _LANE

    if bulk_rows > 0:
        # Zero-copy prefix slice + reshape into a lane-dense (rows, 128) slab.
        x2 = x_flat[:bulk_total].reshape(bulk_rows, _LANE)
        y2 = y_flat[:bulk_total].reshape(bulk_rows, _LANE)

        in_map = lambda p, i: (p * n_inner + i, 0)
        kernel = functools.partial(_kl_div_partial_kernel,
                                   row_tile=row_tile, chunk_rows=chunk_rows)
        partials = pl.pallas_call(
            kernel,
            out_shape=jax.ShapeDtypeStruct((n_par * _SUBLANE, _LANE), jnp.float32),
            grid_spec=pltpu.PrefetchScalarGridSpec(
                num_scalar_prefetch=0,
                grid=(n_par, n_inner),
                in_specs=[
                    pl.BlockSpec((row_tile, _LANE), in_map),
                    pl.BlockSpec((row_tile, _LANE), in_map),
                ],
                out_specs=pl.BlockSpec((_SUBLANE, _LANE), lambda p, i: (p, 0)),
            ),
            compiler_params=pltpu.CompilerParams(
                dimension_semantics=("parallel", "arbitrary"),
                vmem_limit_bytes=_VMEM_LIMIT_BYTES,
            ),
        )(x2, y2)
        bulk_sum = jnp.sum(partials)
    else:
        bulk_sum = jnp.float32(0.0)

    # Ragged remainder (real data, not padding) reduced with fused jnp — reads
    # each leftover element exactly once; no concatenate / no wasted DMA.
    tail = total - bulk_total
    if tail:
        xt = x_flat[bulk_total:].astype(jnp.float32)
        yt = y_flat[bulk_total:].astype(jnp.float32)
        m = yt > 0.0
        safe = jnp.where(m, yt, 1.0)
        tail_sum = jnp.sum(jnp.where(m, yt * jnp.log(safe / xt), 0.0))
    else:
        tail_sum = jnp.float32(0.0)

    # reduction='mean': global sum / element count.
    return (bulk_sum + tail_sum) / jnp.float32(total)


def _reference(inp, tgt):
    x = inp.astype(jnp.float32)
    y = tgt.astype(jnp.float32)
    m = y > 0
    safe = jnp.where(m, y, 1.0)
    term = jnp.where(m, y * (jnp.log(safe) - jnp.log(x)), 0.0)
    return jnp.mean(term)


if __name__ == "__main__":
    key = jax.random.PRNGKey(0)
    k1, k2, k3, k4 = jax.random.split(key, 4)

    N, C, H, W = 2, 4, 16, 16  # NCHW, same convention as the PyTorch module

    # Strictly positive probability-like tensors (input is logged in forward).
    inp = jax.nn.softmax(
        jax.random.normal(k1, (N, C, H, W), jnp.float32).reshape(N, -1),
        axis=-1).reshape(N, C, H, W)
    tgt = jax.nn.softmax(
        jax.random.normal(k2, (N, C, H, W), jnp.float32).reshape(N, -1),
        axis=-1).reshape(N, C, H, W)

    ref = _reference(inp, tgt)

    # Default path (single block for this small input).
    loss = jax.block_until_ready(kl_div_loss(inp, tgt))
    assert jnp.allclose(loss, ref, rtol=1e-5, atol=1e-6), (loss, ref)

    # Exercise the multi-block + 2-way parallel-partials path with tiny tiles.
    loss_par = jax.block_until_ready(
        kl_div_loss(inp, tgt,
                    block_bytes_per_input=_SUBLANE * _LANE * 4,
                    par_slices=2, min_rows_per_slice=8))
    assert jnp.allclose(loss_par, ref, rtol=1e-5, atol=1e-6), (loss_par, ref)

    # Ragged total (wrapper-side tail path) + exact zeros in the target.
    shape = (3, 5, 7, 11)
    inp2 = jax.nn.softmax(
        jax.random.normal(k3, shape, jnp.float32).reshape(1, -1),
        axis=-1).reshape(shape)
    tgt2 = jax.nn.softmax(
        jax.random.normal(k4, shape, jnp.float32).reshape(1, -1),
        axis=-1).reshape(shape)
    tgt2 = tgt2.at[..., :2].set(0.0)   # exercise the y == 0 -> l = 0 convention
    ref2 = _reference(inp2, tgt2)
    loss2 = jax.block_until_ready(kl_div_loss(inp2, tgt2))
    assert jnp.allclose(loss2, ref2, rtol=1e-5, atol=1e-6), (loss2, ref2)

    print("KERNEL_OK")
</pallas_src>

<mosaic_0001>
module attributes {stable_mosaic.version = 11 : i64} {
  func.func @_kl_div_partial_kernel(%arg0: i32, %arg1: i32, %arg2: memref<16x128xf32, #tpu.memory_space<vmem>>, %arg3: memref<16x128xf32, #tpu.memory_space<vmem>>, %arg4: memref<8x128xf32, #tpu.memory_space<vmem>>) attributes {dimension_semantics = [#tpu.dimension_semantics<parallel>, #tpu.dimension_semantics<arbitrary>], iteration_bounds = array<i64: 1, 1>, scalar_prefetch = 0 : i64, scratch_operands = 0 : i64, tpu.core_type = #tpu.core_type<tc>, window_params = [{transform_indices = @transform_0, window_bounds = array<i64: 16, 128>}, {transform_indices = @transform_1, window_bounds = array<i64: 16, 128>}, {transform_indices = @transform_2, window_bounds = array<i64: 8, 128>}]} {
    %c0_i32 = arith.constant 0 : i32
    %0 = arith.cmpi eq, %arg1, %c0_i32 : i32
    %1 = arith.extui %0 : i1 to i32
    %c0_i32_0 = arith.constant 0 : i32
    %2 = arith.cmpi ne, %1, %c0_i32_0 : i32
    scf.if %2 {
      %cst_11 = arith.constant 0.000000e+00 : f32
      %25 = vector.broadcast %cst_11 : f32 to vector<8x128xf32>
      %c0_12 = arith.constant 0 : index
      %c0_13 = arith.constant 0 : index
      %26 = vector.load %arg4[%c0_12, %c0_13] : memref<8x128xf32, #tpu.memory_space<vmem>>, vector<8x128xf32>
      tpu.vector_store %arg4[%c0_12, %c0_13], %25 {strides = array<i32>} : memref<8x128xf32, #tpu.memory_space<vmem>>, vector<8x128xf32>,
    } else {
    }
    %cst = arith.constant 0.000000e+00 : f32
    %3 = vector.broadcast %cst : f32 to vector<8x128xf32>
    %c0_i32_1 = arith.constant 0 : i32
    %c16_i32 = arith.constant 16 : i32
    %4 = arith.muli %c0_i32_1, %c16_i32 : i32
    %5 = tpu.assume_multiple %4, 8 : i32
    %6 = arith.index_cast %5 : i32 to index
    %c0 = arith.constant 0 : index
    %7 = vector.load %arg2[%6, %c0] : memref<16x128xf32, #tpu.memory_space<vmem>>, vector<16x128xf32>
    %8 = arith.index_cast %5 : i32 to index
    %c0_2 = arith.constant 0 : index
    %9 = vector.load %arg3[%8, %c0_2] : memref<16x128xf32, #tpu.memory_space<vmem>>, vector<16x128xf32>
    %cst_3 = arith.constant 0.000000e+00 : f32
    %10 = vector.broadcast %cst_3 : f32 to vector<16x128xf32>
    %11 = arith.cmpf ogt, %9, %10 : vector<16x128xf32>
    %cst_4 = arith.constant 1.000000e+00 : f32
    %12 = vector.broadcast %cst_4 : f32 to vector<16x128xf32>
    %13 = arith.select %11, %9, %12 : vector<16x128xi1>, vector<16x128xf32>
    %14 = arith.divf %13, %7 : vector<16x128xf32>
    %15 = math.log %14 : vector<16x128xf32>
    %16 = arith.mulf %9, %15 : vector<16x128xf32>
    %cst_5 = arith.constant 0.000000e+00 : f32
    %17 = vector.broadcast %cst_5 : f32 to vector<16x128xf32>
    %18 = arith.select %11, %16, %17 : vector<16x128xi1>, vector<16x128xf32>
    %19 = vector.shape_cast %18 : vector<16x128xf32> to vector<2x8x128xf32>
    %cst_6 = arith.constant dense<0.000000e+00> : vector<8x128xf32>
    %20 = vector.multi_reduction <add>, %19, %cst_6 [0] : vector<2x8x128xf32> to vector<8x128xf32>
    %21 = arith.addf %3, %20 : vector<8x128xf32>
    %c1_i32 = arith.constant 1 : i32
    %c0_7 = arith.constant 0 : index
    %c0_8 = arith.constant 0 : index
    %22 = vector.load %arg4[%c0_7, %c0_8] : memref<8x128xf32, #tpu.memory_space<vmem>>, vector<8x128xf32>
    %23 = arith.addf %22, %21 : vector<8x128xf32>
    %c0_9 = arith.constant 0 : index
    %c0_10 = arith.constant 0 : index
    %24 = vector.load %arg4[%c0_9, %c0_10] : memref<8x128xf32, #tpu.memory_space<vmem>>, vector<8x128xf32>
    tpu.vector_store %arg4[%c0_9, %c0_10], %23 {strides = array<i32>} : memref<8x128xf32, #tpu.memory_space<vmem>>, vector<8x128xf32>,
    return
  }
  func.func @transform_0(%arg0: i32, %arg1: i32) -> (i32, i32) {
    %c1_i32 = arith.constant 1 : i32
    %0 = arith.muli %arg0, %c1_i32 : i32
    %1 = arith.addi %0, %arg1 : i32
    %c0_i32 = arith.constant 0 : i32
    %c0_i32_0 = arith.constant 0 : i32
    return %1, %c0_i32 : i32, i32
  }
  func.func @transform_1(%arg0: i32, %arg1: i32) -> (i32, i32) {
    %c1_i32 = arith.constant 1 : i32
    %0 = arith.muli %arg0, %c1_i32 : i32
    %1 = arith.addi %0, %arg1 : i32
    %c0_i32 = arith.constant 0 : i32
    %c0_i32_0 = arith.constant 0 : i32
    return %1, %c0_i32 : i32, i32
  }
  func.func @transform_2(%arg0: i32, %arg1: i32) -> (i32, i32) {
    %c0_i32 = arith.constant 0 : i32
    %c0_i32_0 = arith.constant 0 : i32
    return %arg0, %c0_i32 : i32, i32
  }
}

</mosaic_0001>

<llo_original>
// kernel: tpu_custom_call.1
$region0: #{tpu_custom_call.1}
  #allocation0 [shape = 'u32[]', space=smem, size = 0x4, offset = 0x4, fixed_abs, tag = 'smem constant byte address 0x4 - core index']
  #allocation1 [shape = 'u32[144,128]{1,0:T(1,128)}', space=vmem, size = 0x12000, scoped, tag = 'internal scratch']
  %s0 = inlined_call_operand.hbm [shape: f32[16,128], index: 0, kind: input, shape index: {}]
  %s1 = inlined_call_operand.hbm [shape: f32[16,128], index: 1, kind: input, shape index: {}]
  %s2 = inlined_call_operand.hbm [shape: f32[8,128], index: 2, kind: output, shape index: {}]
  %s3 = sld [smem:[#allocation0]]
  $region30: #{tpu_custom_call.1} parent=0
    _
  %s5 = ssub.s32 1, %s3
  %s6 = scalar_select 0, %s5, %s3
  $region1: #{tpu_custom_call.1} parent=0
    #allocation2 [shape = 'u8[8192]{0}', space=vmem, size = 0x2000, scoped, tag = 'input window, operand 0, single buffered']
    #allocation3 [shape = 's32[1]{0}', space=sflag, size = 0x4, scoped, tag = 'scoped memory for tpu_custom_call.1']
    #allocation4 [shape = 's32[1]{0}', space=sflag, size = 0x4, scoped, tag = 'scoped memory for tpu_custom_call.1']
    #allocation5 [shape = 'u8[8192]{0}', space=vmem, size = 0x2000, scoped, tag = 'input window, operand 1, single buffered']
    #allocation6 [shape = 's32[1]{0}', space=sflag, size = 0x4, scoped, tag = 'scoped memory for tpu_custom_call.1']
    #allocation7 [shape = 'u8[4096]{0}', space=vmem, size = 0x1000, scoped, tag = 'output window, operand 0, single buffered']
    %7 = vsyncpa [#allocation3], 0
    %8 = vsyncpa [#allocation6], 0
    %9 = vsyncpa [#allocation4], 0
    // Predicated region
    $region2: #{tpu_custom_call.1} parent=1 // pred_check
      _
    $region3: #{tpu_custom_call.1} parent=1 // pred_check_branch
      %11 = sbr.rel (0) target = $region5
    $region4: #{tpu_custom_call.1} parent=1 // pred_region
      %s12 = sadd.s32 0, 0
      %s13 = smul.u32 2, %s12
      %s15 = ssub.s32 256, 256
      %16 = vsyncadd [#allocation3], %s15
      %s17 = smul.addr %s13, 128
      %s18 = scalar_lea.hbm %s0, %s17
      %s19 = sshll.u32 [#allocation2], 4
      %s20 = int_to_ptr.vmem [resolvable:$true] %s19
      %25 = dma.hbm_to_vmem [thread:$0]  %s18, 256, %s20, [#allocation3], 128, 128, 8
    $region5: #{tpu_custom_call.1} parent=1 // pred_fallthru
      _
    // Predicated region
    $region6: #{tpu_custom_call.1} parent=1 // pred_check
      _
    $region7: #{tpu_custom_call.1} parent=1 // pred_check_branch
      %27 = sbr.rel (0) target = $region9
    $region8: #{tpu_custom_call.1} parent=1 // pred_region
      %s28 = sadd.s32 0, 0
      %s29 = smul.u32 2, %s28
      %s31 = ssub.s32 256, 256
      %32 = vsyncadd [#allocation6], %s31
      %s33 = smul.addr %s29, 128
      %s34 = scalar_lea.hbm %s1, %s33
      %s35 = sshll.u32 [#allocation5], 4
      %s36 = int_to_ptr.vmem [resolvable:$true] %s35
      %41 = dma.hbm_to_vmem [thread:$0]  %s34, 256, %s36, [#allocation6], 128, 128, 8
    $region9: #{tpu_custom_call.1} parent=1 // pred_fallthru
      _
    // Predicated region
    $region10: #{tpu_custom_call.1} parent=1 // pred_check
      _
    $region11: #{tpu_custom_call.1} parent=1 // pred_check_branch
      %43 = sbr.rel (0) target = $region13
    $region12: #{tpu_custom_call.1} parent=1 // pred_region
      %44 = dma.done [#allocation3], 256
    $region13: #{tpu_custom_call.1} parent=1 // pred_fallthru
      _
    // Predicated region
    $region14: #{tpu_custom_call.1} parent=1 // pred_check
      _
    $region15: #{tpu_custom_call.1} parent=1 // pred_check_branch
      %46 = sbr.rel (0) target = $region17
    $region16: #{tpu_custom_call.1} parent=1 // pred_region
      %47 = dma.done [#allocation6], 256
    $region17: #{tpu_custom_call.1} parent=1 // pred_fallthru
      _
    %s48 = sadd.s32 0, 0
    %s49 = smul.u32 2, %s48
    %s50 = sadd.s32 0, 0
    %s51 = smul.u32 2, %s50
    %p52 = scmp.eq.s32.totalorder 0, 0
    // Predicated region
    $region18: #{tpu_custom_call.1} parent=1 // pred_check
      %p53 = pneg %p52
    $region19: #{tpu_custom_call.1} parent=1 // pred_check_branch
      %55 = sbr.rel (%p53) target = $region21
    $region20: #{tpu_custom_call.1} parent=1 // pred_region
      %56 = vst [vmem:[#allocation7] sm:$0xff] 0.0
    $region21: #{tpu_custom_call.1} parent=1 // pred_fallthru
      _
    %v57 = vld [vmem:[#allocation2] sm:$0xff]
    %v58 = vld [vmem:[#allocation2 + $0x8] sm:$0xff]
    %v59 = vld [vmem:[#allocation5] sm:$0xff]
    %v60 = vld [vmem:[#allocation5 + $0x8] sm:$0xff]
    %vm61 = vcmp.gt.f32.partialorder %v59, 0.0
    %vm62 = vcmp.gt.f32.partialorder %v60, 0.0
    %v63 = vsel %vm61, %v59, 1.0
    %v64 = vsel %vm62, %v60, 1.0
    %v65 = vrcp.pop %v57
    %v66 = vmul.f32 %v63, %v65
    %v67 = vrcp.pop %v58
    %v68 = vmul.f32 %v64, %v67
    %v69 = vlog2.pop %v66
    %v70 = vmul.f32 %v69, 0.6931472
    %v71 = vlog2.pop %v68
    %v72 = vmul.f32 %v71, 0.6931472
    %v73 = vmul.f32 %v59, %v70
    %v74 = vmul.f32 %v60, %v72
    %v75 = vsel %vm61, %v73, 0.0
    %v76 = vsel %vm62, %v74, 0.0
    %v77 = vadd.f32 %v75, %v76
    %v78 = vadd.f32 %v77, 0.0
    %v79 = vld [vmem:[#allocation7] sm:$0xff]
    %v80 = vadd.f32 %v79, %v78
    %81 = vst [vmem:[#allocation7] sm:$0xff] %v80
    // Predicated region
    $region22: #{tpu_custom_call.1} parent=1 // pred_check
      _
    $region23: #{tpu_custom_call.1} parent=1 // pred_check_branch
      %83 = sbr.rel (0) target = $region25
    $region24: #{tpu_custom_call.1} parent=1 // pred_region
      %s85 = ssub.s32 128, 128
      %86 = vsyncadd [#allocation4], %s85
      %s88 = sshll.u32 [#allocation7], 4
      %s89 = int_to_ptr.vmem [resolvable:$true] %s88
      %91 = dma.vmem_to_hbm [thread:$0]  %s89, 128, %s2, [#allocation4]
    $region25: #{tpu_custom_call.1} parent=1 // pred_fallthru
      _
    // Predicated region
    $region26: #{tpu_custom_call.1} parent=1 // pred_check
      _
    $region27: #{tpu_custom_call.1} parent=1 // pred_check_branch
      %93 = sbr.rel (0) target = $region29
    $region28: #{tpu_custom_call.1} parent=1 // pred_region
      %94 = dma.done [#allocation4], 128
    $region29: #{tpu_custom_call.1} parent=1 // pred_fallthru
      _
    %95 = vsyncpa [#allocation3], 1
    %96 = vsyncpa [#allocation6], 1
    %97 = vsyncpa [#allocation4], 1

</llo_original>
